<compile_context>
chip_gen: v7x
topology: tpu7x:2x2x1
jax: 0.10.0
libtpu: 0.0.40
codegen_flags: <defaults>
</compile_context>

<pallas_src>
import functools

import numpy as np
import jax
import jax.numpy as jnp
from jax.experimental import pallas as pl
from jax.experimental.pallas import tpu as pltpu


# ------------------------------- helpers -------------------------------------

def _round_up(x, m):
    return int((x + m - 1) // m * m)


def _choose_k_tiling(kd, cap=1024):
    """Return (tk, kd_pad) with tk | kd_pad and both multiples of 128."""
    kd128 = _round_up(kd, 128)
    if kd128 <= cap:
        return kd128, kd128
    return cap, _round_up(kd128, cap)


# ----------------------------- Pallas kernel ---------------------------------

def _conv_gemm_kernel(p_ref, w_ref, b_ref, o_ref, acc_ref, *,
                      negative_slope, apply_act):
    # p_ref: (tm, tk) bf16   w_ref: (tk, N_pad) bf16   b_ref: (1, N_pad) f32
    # o_ref: (tm, N_pad)     acc_ref: (tm, N_pad) f32 scratch
    k = pl.program_id(1)

    @pl.when(k == 0)
    def _init():
        acc_ref[...] = jnp.zeros_like(acc_ref)

    acc_ref[...] += jnp.dot(p_ref[...], w_ref[...],
                            preferred_element_type=jnp.float32)

    @pl.when(k == pl.num_programs(1) - 1)
    def _epilogue():
        y = acc_ref[...] + b_ref[...]
        if apply_act:
            y = jnp.where(y >= 0, y, negative_slope * y)
        o_ref[...] = y.astype(o_ref.dtype)


def _gemm_bias_act(patches, w_mm, b_mm, *, tm, tk, apply_act, negative_slope,
                   out_dtype):
    """(M_pad, Kd_pad) @ (Kd_pad, N_pad) + bias (+LeakyReLU), tiled on M and K."""
    m_pad, kd_pad = patches.shape
    _, n_pad = w_mm.shape
    grid = (m_pad // tm, kd_pad // tk)

    kernel = functools.partial(_conv_gemm_kernel,
                               negative_slope=negative_slope,
                               apply_act=apply_act)

    out_itemsize = jnp.dtype(out_dtype).itemsize
    vmem_est = (2 * tm * tk * 2            # double-buffered patch tiles (bf16)
                + 2 * tk * n_pad * 2       # double-buffered weight tiles (bf16)
                + 2 * tm * n_pad * out_itemsize
                + tm * n_pad * 4           # f32 accumulator scratch
                + 2 * n_pad * 4)           # bias
    vmem_limit = int(min(32 * 1024 * 1024, max(2 * vmem_est, 8 * 1024 * 1024)))

    return pl.pallas_call(
        kernel,
        out_shape=jax.ShapeDtypeStruct((m_pad, n_pad), out_dtype),
        grid_spec=pltpu.PrefetchScalarGridSpec(
            num_scalar_prefetch=0,
            grid=grid,
            in_specs=[
                pl.BlockSpec((tm, tk), lambda i, k: (i, k)),
                pl.BlockSpec((tk, n_pad), lambda i, k: (k, 0)),
                pl.BlockSpec((1, n_pad), lambda i, k: (0, 0)),
            ],
            out_specs=pl.BlockSpec((tm, n_pad), lambda i, k: (i, 0)),
            scratch_shapes=[pltpu.VMEM((tm, n_pad), jnp.float32)],
        ),
        compiler_params=pltpu.CompilerParams(
            dimension_semantics=("parallel", "arbitrary"),
            vmem_limit_bytes=vmem_limit,
        ),
    )(patches, w_mm, b_mm)


# ------------------------------ layer wrapper ---------------------------------

def conv_period_layer(x, lyr):
    """Conv2d with (kh, 1) kernel (+ optional LeakyReLU), period folded into batch.

    x: (B*period, H, Cin) channels-last bf16 -> (B*period, Hout, Cout).
    """
    bp, h, cin = x.shape
    kh, stride, pad = lyr["kh"], lyr["stride"], lyr["pad"]
    cout = lyr["cout"]

    x_pad = jnp.pad(x, ((0, 0), (pad, pad), (0, 0)))
    hout = (h + 2 * pad - kh) // stride + 1

    # im2col along the frame axis only (channels-last: cheap gather, no transpose).
    # TODO(synk): for very long sequences, stream the input tile and loop over the
    # kh taps in-kernel instead of materializing the kh-duplicated patches in HBM.
    idx = jnp.arange(hout)[:, None] * stride + jnp.arange(kh)[None, :]   # (Hout, kh)
    patches = x_pad[:, idx, :]                       # (BP, Hout, kh, Cin)
    patches = patches.reshape(bp * hout, kh * cin)   # column index = dk*Cin + c

    m = bp * hout
    kd = kh * cin
    tm = min(256, _round_up(m, 128))
    m_pad = _round_up(m, tm)
    kd_pad = lyr["w_mm"].shape[0]
    patches = jnp.pad(patches, ((0, m_pad - m), (0, kd_pad - kd)))

    out = _gemm_bias_act(patches, lyr["w_mm"], lyr["b_mm"],
                         tm=tm, tk=lyr["tk"], apply_act=lyr["act"],
                         negative_slope=lyr["negative_slope"],
                         out_dtype=lyr["out_dtype"])
    return out[:m, :cout].reshape(bp, hout, cout)


# ----------------------- module construction / forward ------------------------

def _prep_layer(w, b, *, stride, pad, act, negative_slope, out_dtype):
    # w: (Cout, Cin, Kh) f32 (torch Conv2d weight with the width-1 kernel axis
    # squeezed), b: (Cout,) f32.  Pack ONCE into the MXU-ready padded layout.
    cout, cin, kh = w.shape
    kd = kh * cin
    tk, kd_pad = _choose_k_tiling(kd)
    n_pad = _round_up(cout, 128)          # lane-dense output stores

    # (Cout, Cin, Kh) -> (Kh, Cin, Cout): row index dk*Cin + c matches the
    # channels-last im2col column layout.
    w_mm = jnp.transpose(w, (2, 1, 0)).reshape(kd, cout)
    w_mm = jnp.pad(w_mm, ((0, kd_pad - kd), (0, n_pad - cout))).astype(jnp.bfloat16)
    b_mm = jnp.pad(b, (0, n_pad - cout)).reshape(1, n_pad).astype(jnp.float32)

    return dict(w_mm=w_mm, b_mm=b_mm, w_ref=w, b_ref=b, kh=kh, stride=stride,
                pad=pad, cout=cout, act=act, negative_slope=negative_slope,
                tk=tk, out_dtype=out_dtype)


def build_hifigan_period_discriminator(key, in_channels=1, out_channels=1,
                                       period=3, kernel_sizes=(5, 3), channels=32,
                                       downsample_scales=(3, 3, 3, 3, 1),
                                       max_downsample_channels=1024,
                                       negative_slope=0.1):
    assert len(kernel_sizes) == 2
    assert kernel_sizes[0] % 2 == 1 and kernel_sizes[1] % 2 == 1
    # weight_norm / spectral_norm only reparametrize the weights; the forward
    # values are identical, so the effective weights are used directly.

    def make_conv(kk, cout, cin, kh):
        fan_in = cin * kh
        bound = 1.0 / np.sqrt(fan_in)
        k1, k2 = jax.random.split(kk)
        w = jax.random.uniform(k1, (cout, cin, kh), jnp.float32, -bound, bound)
        b = jax.random.uniform(k2, (cout,), jnp.float32, -bound, bound)
        return w, b

    keys = jax.random.split(key, len(downsample_scales) + 1)
    layers = []
    in_chs, out_chs = in_channels, channels
    for i, ds in enumerate(downsample_scales):
        w, b = make_conv(keys[i], out_chs, in_chs, kernel_sizes[0])
        layers.append(_prep_layer(w, b, stride=ds, pad=(kernel_sizes[0] - 1) // 2,
                                  act=True, negative_slope=negative_slope,
                                  out_dtype=jnp.bfloat16))
        in_chs = out_chs
        out_chs = min(out_chs * 4, max_downsample_channels)

    # Like the torch module, the output conv uses the post-loop `out_chs`; the
    # config must have saturated max_downsample_channels so channels line up.
    assert out_chs == in_chs, "config must saturate max_downsample_channels"
    w, b = make_conv(keys[-1], out_channels, out_chs, kernel_sizes[1] - 1)
    layers.append(_prep_layer(w, b, stride=1, pad=(kernel_sizes[1] - 1) // 2,
                              act=False, negative_slope=negative_slope,
                              out_dtype=jnp.float32))
    return dict(period=period, layers=layers)


def hifigan_period_discriminator_forward(params, x, return_fmaps=False):
    """x: (B, in_channels, T) -> (B, out_channels * T' * period), like torch."""
    period = params["period"]
    layers = params["layers"]
    b, c, t = x.shape
    if t % period != 0:
        n_pad = period - t % period
        x = jnp.pad(x, ((0, 0), (0, 0), (0, n_pad)), mode="reflect")
        t += n_pad
    h = t // period
    x = x.reshape(b, c, h, period)                            # (B, C, H, P) == torch .view
    # Fold period into batch, go channels-last for all hidden layers.
    x = jnp.transpose(x, (0, 3, 2, 1)).reshape(b * period, h, c).astype(jnp.bfloat16)

    def to_nchw(a):                                           # (BP, H, C) -> (B, C, H, P)
        bp, hh, cc = a.shape
        return jnp.transpose(a.reshape(b, period, hh, cc), (0, 3, 2, 1))

    fmaps = []
    for i, lyr in enumerate(layers):
        x = conv_period_layer(x, lyr)
        if return_fmaps and i < len(layers) - 1:
            fmaps.append(to_nchw(x).astype(jnp.float32))

    out = to_nchw(x)                                          # (B, Cout, Hf, P), f32
    out = out.reshape(b, -1)                                  # torch.flatten(x, 1, -1)
    return (out, fmaps) if return_fmaps else out


# ------------------------------ pure-JAX reference ----------------------------

def _ref_forward(params, x):
    period = params["period"]
    layers = params["layers"]
    b, c, t = x.shape
    if t % period != 0:
        n_pad = period - t % period
        x = jnp.pad(x, ((0, 0), (0, 0), (0, n_pad)), mode="reflect")
        t += n_pad
    xr = x.reshape(b, c, t // period, period)
    for lyr in layers:
        w = lyr["w_ref"].astype(jnp.bfloat16)[..., None]      # (O, I, Kh, 1)
        y = jax.lax.conv_general_dilated(
            xr.astype(jnp.bfloat16), w,
            window_strides=(lyr["stride"], 1),
            padding=[(lyr["pad"], lyr["pad"]), (0, 0)],
            dimension_numbers=("NCHW", "OIHW", "NCHW"),
            preferred_element_type=jnp.float32)
        y = y + lyr["b_ref"][None, :, None, None]
        if lyr["act"]:
            y = jnp.where(y >= 0, y, lyr["negative_slope"] * y)
        xr = y.astype(lyr["out_dtype"])
    return xr.astype(jnp.float32).reshape(b, -1)


# ------------------------------------ main -------------------------------------

if __name__ == "__main__":
    key = jax.random.PRNGKey(0)
    k_param, k_x = jax.random.split(key)

    # Small but structurally faithful config: period reshape + reflect pad,
    # strided (k,1) convs with 4x channel growth capped at max_downsample_channels,
    # LeakyReLU(0.1), and the (k2-1, 1) output conv + flatten.
    params = build_hifigan_period_discriminator(
        k_param, in_channels=1, out_channels=1, period=3, kernel_sizes=(5, 3),
        channels=4, downsample_scales=(3, 3, 1), max_downsample_channels=16,
        negative_slope=0.1)

    B, T = 2, 50        # T % period != 0 -> exercises the reflect-pad path
    x = jax.random.normal(k_x, (B, 1, T), dtype=jnp.float32)

    fwd = jax.jit(functools.partial(hifigan_period_discriminator_forward, params))
    out = fwd(x)
    jax.block_until_ready(out)

    ref = _ref_forward(params, x)
    assert out.shape == ref.shape, (out.shape, ref.shape)
    np.testing.assert_allclose(np.asarray(out, dtype=np.float32),
                               np.asarray(ref, dtype=np.float32),
                               rtol=1e-2, atol=1e-2)
    print("KERNEL_OK")
</pallas_src>

<mosaic_0001>
module attributes {stable_mosaic.version = 11 : i64} {
  func.func @_conv_gemm_kernel(%arg0: i32, %arg1: i32, %arg2: memref<128x128xbf16, #tpu.memory_space<vmem>>, %arg3: memref<128x128xbf16, #tpu.memory_space<vmem>>, %arg4: memref<1x128xf32, #tpu.memory_space<vmem>>, %arg5: memref<128x128xbf16, #tpu.memory_space<vmem>>, %arg6: memref<128x128xf32, #tpu.memory_space<vmem>>) attributes {dimension_semantics = [#tpu.dimension_semantics<parallel>, #tpu.dimension_semantics<arbitrary>], iteration_bounds = array<i64: 1, 1>, scalar_prefetch = 0 : i64, scratch_operands = 1 : i64, tpu.core_type = #tpu.core_type<tc>, window_params = [{transform_indices = @transform_0, window_bounds = array<i64: 128, 128>}, {transform_indices = @transform_1, window_bounds = array<i64: 128, 128>}, {pipeline_mode = #tpu.pipeline_mode<synchronous>, transform_indices = @transform_2, window_bounds = array<i64: 1, 128>}, {transform_indices = @transform_3, window_bounds = array<i64: 128, 128>}]} {
    %c0_i32 = arith.constant 0 : i32
    %0 = arith.cmpi eq, %arg1, %c0_i32 : i32
    %1 = arith.extui %0 : i1 to i32
    %c0_i32_0 = arith.constant 0 : i32
    %2 = arith.cmpi ne, %1, %c0_i32_0 : i32
    scf.if %2 {
      %cst_10 = arith.constant 0.000000e+00 : f32
      %12 = vector.broadcast %cst_10 : f32 to vector<128x128xf32>
      %c0_11 = arith.constant 0 : index
      %c0_12 = arith.constant 0 : index
      %13 = vector.load %arg6[%c0_11, %c0_12] : memref<128x128xf32, #tpu.memory_space<vmem>>, vector<128x128xf32>
      tpu.vector_store %arg6[%c0_11, %c0_12], %12 {strides = array<i32>} : memref<128x128xf32, #tpu.memory_space<vmem>>, vector<128x128xf32>,
    } else {
    }
    %c0 = arith.constant 0 : index
    %c0_1 = arith.constant 0 : index
    %3 = vector.load %arg6[%c0, %c0_1] : memref<128x128xf32, #tpu.memory_space<vmem>>, vector<128x128xf32>
    %c0_2 = arith.constant 0 : index
    %c0_3 = arith.constant 0 : index
    %4 = vector.load %arg2[%c0_2, %c0_3] : memref<128x128xbf16, #tpu.memory_space<vmem>>, vector<128x128xbf16>
    %c0_4 = arith.constant 0 : index
    %c0_5 = arith.constant 0 : index
    %5 = vector.load %arg3[%c0_4, %c0_5] : memref<128x128xbf16, #tpu.memory_space<vmem>>, vector<128x128xbf16>
    %cst = arith.constant dense<0.000000e+00> : vector<128x128xf32>
    %6 = tpu.matmul %4, %5, %cst {dimension_numbers = #tpu.dot_dimension_numbers<[1], [0], [0], [1], [0, 0, 1, 1], [], []>} : vector<128x128xbf16>, vector<128x128xbf16>, vector<128x128xf32> -> vector<128x128xf32>
    %7 = arith.addf %3, %6 : vector<128x128xf32>
    %c0_6 = arith.constant 0 : index
    %c0_7 = arith.constant 0 : index
    %8 = vector.load %arg6[%c0_6, %c0_7] : memref<128x128xf32, #tpu.memory_space<vmem>>, vector<128x128xf32>
    tpu.vector_store %arg6[%c0_6, %c0_7], %7 {strides = array<i32>} : memref<128x128xf32, #tpu.memory_space<vmem>>, vector<128x128xf32>,
    %c0_i32_8 = arith.constant 0 : i32
    %9 = arith.cmpi eq, %arg1, %c0_i32_8 : i32
    %10 = arith.extui %9 : i1 to i32
    %c0_i32_9 = arith.constant 0 : i32
    %11 = arith.cmpi ne, %10, %c0_i32_9 : i32
    scf.if %11 {
      %c0_10 = arith.constant 0 : index
      %c0_11 = arith.constant 0 : index
      %12 = vector.load %arg6[%c0_10, %c0_11] : memref<128x128xf32, #tpu.memory_space<vmem>>, vector<128x128xf32>
      %c0_12 = arith.constant 0 : index
      %c0_13 = arith.constant 0 : index
      %13 = vector.load %arg4[%c0_12, %c0_13] : memref<1x128xf32, #tpu.memory_space<vmem>>, vector<1x128xf32>
      %14 = vector.broadcast %13 : vector<1x128xf32> to vector<128x128xf32>
      %15 = arith.addf %12, %14 : vector<128x128xf32>
      %cst_14 = arith.constant 0.000000e+00 : f32
      %16 = vector.broadcast %cst_14 : f32 to vector<128x128xf32>
      %17 = arith.cmpf oge, %15, %16 : vector<128x128xf32>
      %cst_15 = arith.constant 1.000000e-01 : f32
      %18 = vector.broadcast %cst_15 : f32 to vector<128x128xf32>
      %19 = arith.mulf %18, %15 : vector<128x128xf32>
      %20 = arith.select %17, %15, %19 : vector<128x128xi1>, vector<128x128xf32>
      %21 = arith.truncf %20 : vector<128x128xf32> to vector<128x128xbf16>
      %c0_16 = arith.constant 0 : index
      %c0_17 = arith.constant 0 : index
      %22 = vector.load %arg5[%c0_16, %c0_17] : memref<128x128xbf16, #tpu.memory_space<vmem>>, vector<128x128xbf16>
      tpu.vector_store %arg5[%c0_16, %c0_17], %21 {strides = array<i32>} : memref<128x128xbf16, #tpu.memory_space<vmem>>, vector<128x128xbf16>,
    } else {
    }
    return
  }
  func.func @transform_0(%arg0: i32, %arg1: i32) -> (i32, i32) {
    %c0_i32 = arith.constant 0 : i32
    return %arg0, %arg1 : i32, i32
  }
  func.func @transform_1(%arg0: i32, %arg1: i32) -> (i32, i32) {
    %c0_i32 = arith.constant 0 : i32
    %c0_i32_0 = arith.constant 0 : i32
    return %arg1, %c0_i32 : i32, i32
  }
  func.func @transform_2(%arg0: i32, %arg1: i32) -> (i32, i32) {
    %c0_i32 = arith.constant 0 : i32
    %c0_i32_0 = arith.constant 0 : i32
    %c0_i32_1 = arith.constant 0 : i32
    return %c0_i32, %c0_i32_0 : i32, i32
  }
  func.func @transform_3(%arg0: i32, %arg1: i32) -> (i32, i32) {
    %c0_i32 = arith.constant 0 : i32
    %c0_i32_0 = arith.constant 0 : i32
    return %arg0, %c0_i32 : i32, i32
  }
}

module attributes {stable_mosaic.version = 11 : i64} {
  func.func @_conv_gemm_kernel(%arg0: i32, %arg1: i32, %arg2: memref<128x128xbf16, #tpu.memory_space<vmem>>, %arg3: memref<128x128xbf16, #tpu.memory_space<vmem>>, %arg4: memref<1x128xf32, #tpu.memory_space<vmem>>, %arg5: memref<128x128xf32, #tpu.memory_space<vmem>>, %arg6: memref<128x128xf32, #tpu.memory_space<vmem>>) attributes {dimension_semantics = [#tpu.dimension_semantics<parallel>, #tpu.dimension_semantics<arbitrary>], iteration_bounds = array<i64: 1, 1>, scalar_prefetch = 0 : i64, scratch_operands = 1 : i64, tpu.core_type = #tpu.core_type<tc>, window_params = [{transform_indices = @transform_0, window_bounds = array<i64: 128, 128>}, {transform_indices = @transform_1, window_bounds = array<i64: 128, 128>}, {pipeline_mode = #tpu.pipeline_mode<synchronous>, transform_indices = @transform_2, window_bounds = array<i64: 1, 128>}, {transform_indices = @transform_3, window_bounds = array<i64: 128, 128>}]} {
    %c0_i32 = arith.constant 0 : i32
    %0 = arith.cmpi eq, %arg1, %c0_i32 : i32
    %1 = arith.extui %0 : i1 to i32
    %c0_i32_0 = arith.constant 0 : i32
    %2 = arith.cmpi ne, %1, %c0_i32_0 : i32
    scf.if %2 {
      %cst_10 = arith.constant 0.000000e+00 : f32
      %12 = vector.broadcast %cst_10 : f32 to vector<128x128xf32>
      %c0_11 = arith.constant 0 : index
      %c0_12 = arith.constant 0 : index
      %13 = vector.load %arg6[%c0_11, %c0_12] : memref<128x128xf32, #tpu.memory_space<vmem>>, vector<128x128xf32>
      tpu.vector_store %arg6[%c0_11, %c0_12], %12 {strides = array<i32>} : memref<128x128xf32, #tpu.memory_space<vmem>>, vector<128x128xf32>,
    } else {
    }
    %c0 = arith.constant 0 : index
    %c0_1 = arith.constant 0 : index
    %3 = vector.load %arg6[%c0, %c0_1] : memref<128x128xf32, #tpu.memory_space<vmem>>, vector<128x128xf32>
    %c0_2 = arith.constant 0 : index
    %c0_3 = arith.constant 0 : index
    %4 = vector.load %arg2[%c0_2, %c0_3] : memref<128x128xbf16, #tpu.memory_space<vmem>>, vector<128x128xbf16>
    %c0_4 = arith.constant 0 : index
    %c0_5 = arith.constant 0 : index
    %5 = vector.load %arg3[%c0_4, %c0_5] : memref<128x128xbf16, #tpu.memory_space<vmem>>, vector<128x128xbf16>
    %cst = arith.constant dense<0.000000e+00> : vector<128x128xf32>
    %6 = tpu.matmul %4, %5, %cst {dimension_numbers = #tpu.dot_dimension_numbers<[1], [0], [0], [1], [0, 0, 1, 1], [], []>} : vector<128x128xbf16>, vector<128x128xbf16>, vector<128x128xf32> -> vector<128x128xf32>
    %7 = arith.addf %3, %6 : vector<128x128xf32>
    %c0_6 = arith.constant 0 : index
    %c0_7 = arith.constant 0 : index
    %8 = vector.load %arg6[%c0_6, %c0_7] : memref<128x128xf32, #tpu.memory_space<vmem>>, vector<128x128xf32>
    tpu.vector_store %arg6[%c0_6, %c0_7], %7 {strides = array<i32>} : memref<128x128xf32, #tpu.memory_space<vmem>>, vector<128x128xf32>,
    %c0_i32_8 = arith.constant 0 : i32
    %9 = arith.cmpi eq, %arg1, %c0_i32_8 : i32
    %10 = arith.extui %9 : i1 to i32
    %c0_i32_9 = arith.constant 0 : i32
    %11 = arith.cmpi ne, %10, %c0_i32_9 : i32
    scf.if %11 {
      %c0_10 = arith.constant 0 : index
      %c0_11 = arith.constant 0 : index
      %12 = vector.load %arg6[%c0_10, %c0_11] : memref<128x128xf32, #tpu.memory_space<vmem>>, vector<128x128xf32>
      %c0_12 = arith.constant 0 : index
      %c0_13 = arith.constant 0 : index
      %13 = vector.load %arg4[%c0_12, %c0_13] : memref<1x128xf32, #tpu.memory_space<vmem>>, vector<1x128xf32>
      %14 = vector.broadcast %13 : vector<1x128xf32> to vector<128x128xf32>
      %15 = arith.addf %12, %14 : vector<128x128xf32>
      %c0_14 = arith.constant 0 : index
      %c0_15 = arith.constant 0 : index
      %16 = vector.load %arg5[%c0_14, %c0_15] : memref<128x128xf32, #tpu.memory_space<vmem>>, vector<128x128xf32>
      tpu.vector_store %arg5[%c0_14, %c0_15], %15 {strides = array<i32>} : memref<128x128xf32, #tpu.memory_space<vmem>>, vector<128x128xf32>,
    } else {
    }
    return
  }
  func.func @transform_0(%arg0: i32, %arg1: i32) -> (i32, i32) {
    %c0_i32 = arith.constant 0 : i32
    return %arg0, %arg1 : i32, i32
  }
  func.func @transform_1(%arg0: i32, %arg1: i32) -> (i32, i32) {
    %c0_i32 = arith.constant 0 : i32
    %c0_i32_0 = arith.constant 0 : i32
    return %arg1, %c0_i32 : i32, i32
  }
  func.func @transform_2(%arg0: i32, %arg1: i32) -> (i32, i32) {
    %c0_i32 = arith.constant 0 : i32
    %c0_i32_0 = arith.constant 0 : i32
    %c0_i32_1 = arith.constant 0 : i32
    return %c0_i32, %c0_i32_0 : i32, i32
  }
  func.func @transform_3(%arg0: i32, %arg1: i32) -> (i32, i32) {
    %c0_i32 = arith.constant 0 : i32
    %c0_i32_0 = arith.constant 0 : i32
    return %arg0, %c0_i32 : i32, i32
  }
}

</mosaic_0001>

<llo_original>
// kernel: hifigan_period_discriminator_forward.4
$region0: #{hifigan_period_discriminator_forward.4}
  #allocation0 [shape = 'u32[]', space=smem, size = 0x4, offset = 0x4, fixed_abs, tag = 'smem constant byte address 0x4 - core index']
  #allocation1 [shape = 'u32[144,128]{1,0:T(1,128)}', space=vmem, size = 0x12000, scoped, tag = 'internal scratch']
  #allocation2 [shape = 'f32[128,128]{1,0:T(8,128)}', space=vmem, size = 0x10000, scoped, tag = 'scratch operand']
  %s0 = inlined_call_operand.vmem [shape: bf16[128,128], index: 0, kind: input, shape index: {}]
  %s1 = inlined_call_operand.vmem [shape: bf16[128,128], index: 1, kind: input, shape index: {}]
  %s2 = inlined_call_operand.vmem [shape: f32[1,128], index: 2, kind: input, shape index: {}]
  %s3 = inlined_call_operand.vmem [shape: bf16[128,128], index: 3, kind: output, shape index: {}]
  %s4 = sld [smem:[#allocation0]]
  $region30: #{hifigan_period_discriminator_forward.4} parent=0
    _
  %s6 = ssub.s32 1, %s4
  %s7 = scalar_select 0, %s6, %s4
  // Predicated region
  $region2: #{hifigan_period_discriminator_forward.4} parent=0 // pred_check
    _
  $region3: #{hifigan_period_discriminator_forward.4} parent=0 // pred_check_branch
    %9 = sbr.rel (0) target = $region5
  $region4: #{hifigan_period_discriminator_forward.4} parent=0 // pred_region
    _
  $region5: #{hifigan_period_discriminator_forward.4} parent=0 // pred_fallthru
    _
  // Predicated region
  $region6: #{hifigan_period_discriminator_forward.4} parent=0 // pred_check
    _
  $region7: #{hifigan_period_discriminator_forward.4} parent=0 // pred_check_branch
    %11 = sbr.rel (0) target = $region9
  $region8: #{hifigan_period_discriminator_forward.4} parent=0 // pred_region
    _
  $region9: #{hifigan_period_discriminator_forward.4} parent=0 // pred_fallthru
    _
  // Predicated region
  $region10: #{hifigan_period_discriminator_forward.4} parent=0 // pred_check
    _
  $region11: #{hifigan_period_discriminator_forward.4} parent=0 // pred_check_branch
    %13 = sbr.rel (0) target = $region13
  $region12: #{hifigan_period_discriminator_forward.4} parent=0 // pred_region
    _
  $region13: #{hifigan_period_discriminator_forward.4} parent=0 // pred_fallthru
    _
  %p15 = scmp.eq.s32.totalorder 0, 0
  // Predicated region
  $region14: #{hifigan_period_discriminator_forward.4} parent=0 // pred_check
    %p16 = pneg %p15
  $region15: #{hifigan_period_discriminator_forward.4} parent=0 // pred_check_branch
    %18 = sbr.rel (%p16) target = $region17
  $region16: #{hifigan_period_discriminator_forward.4} parent=0 // pred_region
    %19 = vst [vmem:[#allocation2] sm:$0xff] 0.0
    %20 = vst [vmem:[#allocation2 + $0x8] sm:$0xff] 0.0
    %21 = vst [vmem:[#allocation2 + $0x10] sm:$0xff] 0.0
    %22 = vst [vmem:[#allocation2 + $0x18] sm:$0xff] 0.0
    %23 = vst [vmem:[#allocation2 + $0x20] sm:$0xff] 0.0
    %24 = vst [vmem:[#allocation2 + $0x28] sm:$0xff] 0.0
    %25 = vst [vmem:[#allocation2 + $0x30] sm:$0xff] 0.0
    %26 = vst [vmem:[#allocation2 + $0x38] sm:$0xff] 0.0
    %27 = vst [vmem:[#allocation2 + $0x40] sm:$0xff] 0.0
    %28 = vst [vmem:[#allocation2 + $0x48] sm:$0xff] 0.0
    %29 = vst [vmem:[#allocation2 + $0x50] sm:$0xff] 0.0
    %30 = vst [vmem:[#allocation2 + $0x58] sm:$0xff] 0.0
    %31 = vst [vmem:[#allocation2 + $0x60] sm:$0xff] 0.0
    %32 = vst [vmem:[#allocation2 + $0x68] sm:$0xff] 0.0
    %33 = vst [vmem:[#allocation2 + $0x70] sm:$0xff] 0.0
    %34 = vst [vmem:[#allocation2 + $0x78] sm:$0xff] 0.0
  $region17: #{hifigan_period_discriminator_forward.4} parent=0 // pred_fallthru
    _
  %v35 = vld [vmem:[#allocation2] sm:$0xff]
  %v36 = vld [vmem:[#allocation2 + $0x8] sm:$0xff]
  %v37 = vld [vmem:[#allocation2 + $0x10] sm:$0xff]
  %v38 = vld [vmem:[#allocation2 + $0x18] sm:$0xff]
  %v39 = vld [vmem:[#allocation2 + $0x20] sm:$0xff]
  %v40 = vld [vmem:[#allocation2 + $0x28] sm:$0xff]
  %v41 = vld [vmem:[#allocation2 + $0x30] sm:$0xff]
  %v42 = vld [vmem:[#allocation2 + $0x38] sm:$0xff]
  %v43 = vld [vmem:[#allocation2 + $0x40] sm:$0xff]
  %v44 = vld [vmem:[#allocation2 + $0x48] sm:$0xff]
  %v45 = vld [vmem:[#allocation2 + $0x50] sm:$0xff]
  %v46 = vld [vmem:[#allocation2 + $0x58] sm:$0xff]
  %v47 = vld [vmem:[#allocation2 + $0x60] sm:$0xff]
  %v48 = vld [vmem:[#allocation2 + $0x68] sm:$0xff]
  %v49 = vld [vmem:[#allocation2 + $0x70] sm:$0xff]
  %v50 = vld [vmem:[#allocation2 + $0x78] sm:$0xff]
  %v51 = vld [vmem:[%s0] sm:$0xf]
  %v52 = vld [vmem:[%s0 + $0x4] sm:$0xf]
  %v53 = vld [vmem:[%s0 + $0x8] sm:$0xf]
  %v54 = vld [vmem:[%s0 + $0xc] sm:$0xf]
  %v55 = vld [vmem:[%s0 + $0x10] sm:$0xf]
  %v56 = vld [vmem:[%s0 + $0x14] sm:$0xf]
  %v57 = vld [vmem:[%s0 + $0x18] sm:$0xf]
  %v58 = vld [vmem:[%s0 + $0x1c] sm:$0xf]
  %v59 = vld [vmem:[%s0 + $0x20] sm:$0xf]
  %v60 = vld [vmem:[%s0 + $0x24] sm:$0xf]
  %v61 = vld [vmem:[%s0 + $0x28] sm:$0xf]
  %v62 = vld [vmem:[%s0 + $0x2c] sm:$0xf]
  %v63 = vld [vmem:[%s0 + $0x30] sm:$0xf]
  %v64 = vld [vmem:[%s0 + $0x34] sm:$0xf]
  %v65 = vld [vmem:[%s0 + $0x38] sm:$0xf]
  %v66 = vld [vmem:[%s0 + $0x3c] sm:$0xf]
  %v67 = vld [vmem:[%s1] sm:$0xf]
  %v68 = vld [vmem:[%s1 + $0x4] sm:$0xf]
  %v69 = vld [vmem:[%s1 + $0x8] sm:$0xf]
  %v70 = vld [vmem:[%s1 + $0xc] sm:$0xf]
  %v71 = vld [vmem:[%s1 + $0x10] sm:$0xf]
  %v72 = vld [vmem:[%s1 + $0x14] sm:$0xf]
  %v73 = vld [vmem:[%s1 + $0x18] sm:$0xf]
  %v74 = vld [vmem:[%s1 + $0x1c] sm:$0xf]
  %v75 = vld [vmem:[%s1 + $0x20] sm:$0xf]
  %v76 = vld [vmem:[%s1 + $0x24] sm:$0xf]
  %v77 = vld [vmem:[%s1 + $0x28] sm:$0xf]
  %v78 = vld [vmem:[%s1 + $0x2c] sm:$0xf]
  %v79 = vld [vmem:[%s1 + $0x30] sm:$0xf]
  %v80 = vld [vmem:[%s1 + $0x34] sm:$0xf]
  %v81 = vld [vmem:[%s1 + $0x38] sm:$0xf]
  %v82 = vld [vmem:[%s1 + $0x3c] sm:$0xf]
  %v99 = vunpack.c.l.b16 %v51
  %v100 = vunpack.c.l.b16 %v52
  %v101 = vunpack.c.l.b16 %v53
  %v102 = vunpack.c.l.b16 %v54
  %v103 = vunpack.c.l.b16 %v55
  %v104 = vunpack.c.l.b16 %v56
  %v105 = vunpack.c.l.b16 %v57
  %v106 = vunpack.c.l.b16 %v58
  %v107 = vunpack.c.l.b16 %v59
  %v108 = vunpack.c.l.b16 %v60
  %v109 = vunpack.c.l.b16 %v61
  %v110 = vunpack.c.l.b16 %v62
  %v111 = vunpack.c.l.b16 %v63
  %v112 = vunpack.c.l.b16 %v64
  %v113 = vunpack.c.l.b16 %v65
  %v114 = vunpack.c.l.b16 %v66
  %v115 = vpack.c.b16 %v100, %v99
  %v116 = vpack.c.b16 %v102, %v101
  %v117 = vpack.c.b16 %v104, %v103
  %v118 = vpack.c.b16 %v106, %v105
  %v119 = vpack.c.b16 %v108, %v107
  %v120 = vpack.c.b16 %v110, %v109
  %v121 = vpack.c.b16 %v112, %v111
  %v122 = vpack.c.b16 %v114, %v113
  %v147 = vunpack.c.l.b16 %v67
  %v148 = vunpack.c.l.b16 %v68
  %v149 = vunpack.c.l.b16 %v69
  %v150 = vunpack.c.l.b16 %v70
  %v151 = vunpack.c.l.b16 %v71
  %v152 = vunpack.c.l.b16 %v72
  %v153 = vunpack.c.l.b16 %v73
  %v154 = vunpack.c.l.b16 %v74
  %v155 = vunpack.c.l.b16 %v75
  %v156 = vunpack.c.l.b16 %v76
  %v157 = vunpack.c.l.b16 %v77
  %v158 = vunpack.c.l.b16 %v78
  %v159 = vunpack.c.l.b16 %v79
  %v160 = vunpack.c.l.b16 %v80
  %v161 = vunpack.c.l.b16 %v81
  %v162 = vunpack.c.l.b16 %v82
  %v163 = vpack.c.b16 %v148, %v147
  %v164 = vpack.c.b16 %v150, %v149
  %v165 = vpack.c.b16 %v152, %v151
  %v166 = vpack.c.b16 %v154, %v153
  %v167 = vpack.c.b16 %v156, %v155
  %v168 = vpack.c.b16 %v158, %v157
  %v169 = vpack.c.b16 %v160, %v159
  %v170 = vpack.c.b16 %v162, %v161
  %179 = vmatprep.subr.bf16.mxu0 0
  %180 = vmatpush1.bf16.msra.mxu0 %v163
  %181 = vmatprep.subr.bf16.mxu0 0
  %182 = vmatpush1.bf16.msra.mxu0 %v164
  %183 = vmatprep.subr.bf16.mxu0 0
  %184 = vmatpush1.bf16.msra.mxu0 %v165
  %185 = vmatprep.subr.bf16.mxu0 0
  %186 = vmatpush1.bf16.msra.mxu0 %v166
  %187 = vmatprep.subr.bf16.mxu0 0
  %188 = vmatpush1.bf16.msra.mxu0 %v167
  %189 = vmatprep.subr.bf16.mxu0 0
  %190 = vmatpush1.bf16.msra.mxu0 %v168
  %191 = vmatprep.subr.bf16.mxu0 0
  %192 = vmatpush1.bf16.msra.mxu0 %v169
  %193 = vmatprep.subr.bf16.mxu0 0
  %194 = vmatpush1.bf16.msra.mxu0 %v170
  %195 = vmatprep.subr.bf16.mxu0 0
  %196 = vmatpush1.bf16.msra.mxu0 0
  %197 = vmatprep.subr.bf16.mxu0 0
  %198 = vmatpush1.bf16.msra.mxu0 0
  %199 = vmatprep.subr.bf16.mxu0 0
  %200 = vmatpush1.bf16.msra.mxu0 0
  %201 = vmatprep.subr.bf16.mxu0 0
  %202 = vmatpush1.bf16.msra.mxu0 0
  %203 = vmatprep.subr.bf16.mxu0 0
  %204 = vmatpush1.bf16.msra.mxu0 0
  %205 = vmatprep.subr.bf16.mxu0 0
  %206 = vmatpush1.bf16.msra.mxu0 0
  %207 = vmatprep.subr.bf16.mxu0 0
  %208 = vmatpush1.bf16.msra.mxu0 0
  %209 = vmatprep.subr.bf16.mxu0 0
  %210 = vmatpush1.bf16.msra.mxu0 0
  %211 = vmatprep.mubr.bf16.mxu0 0
  %212 = vmatmul.mubr.bf16.gmra.mrb[0].mxu0 %v115
  %v213 = vpop.f32.mrb[0].mxu0
  %v214 = vadd.f32 0.0, %v213
  %v215 = vpop.f32.mrb[0].mxu0
  %v216 = vpop.f32.mrb[0].mxu0
  %v217 = vadd.f32 0.0, %v216
  %v218 = vpop.f32.mrb[0].mxu0
  %219 = vmatprep.mubr.bf16.mxu0 0
  %220 = vmatmul.mubr.bf16.gmra.mrb[0].mxu0 %v116
  %v221 = vpop.f32.mrb[0].mxu0
  %v222 = vadd.f32 0.0, %v221
  %v223 = vpop.f32.mrb[0].mxu0
  %v224 = vpop.f32.mrb[0].mxu0
  %v225 = vadd.f32 0.0, %v224
  %v226 = vpop.f32.mrb[0].mxu0
  %227 = vmatprep.mubr.bf16.mxu0 0
  %228 = vmatmul.mubr.bf16.gmra.mrb[0].mxu0 %v117
  %v229 = vpop.f32.mrb[0].mxu0
  %v230 = vadd.f32 0.0, %v229
  %v231 = vpop.f32.mrb[0].mxu0
  %v232 = vpop.f32.mrb[0].mxu0
  %v233 = vadd.f32 0.0, %v232
  %v234 = vpop.f32.mrb[0].mxu0
  %235 = vmatprep.mubr.bf16.mxu0 0
  %236 = vmatmul.mubr.bf16.gmra.mrb[0].mxu0 %v118
  %v237 = vpop.f32.mrb[0].mxu0
  %v238 = vadd.f32 0.0, %v237
  %v239 = vpop.f32.mrb[0].mxu0
  %v240 = vpop.f32.mrb[0].mxu0
  %v241 = vadd.f32 0.0, %v240
  %v242 = vpop.f32.mrb[0].mxu0
  %243 = vmatprep.mubr.bf16.mxu0 0
  %244 = vmatmul.mubr.bf16.gmra.mrb[0].mxu0 %v119
  %v245 = vpop.f32.mrb[0].mxu0
  %v246 = vadd.f32 0.0, %v245
  %v247 = vpop.f32.mrb[0].mxu0
  %v248 = vpop.f32.mrb[0].mxu0
  %v249 = vadd.f32 0.0, %v248
  %v250 = vpop.f32.mrb[0].mxu0
  %251 = vmatprep.mubr.bf16.mxu0 0
  %252 = vmatmul.mubr.bf16.gmra.mrb[0].mxu0 %v120
  %v253 = vpop.f32.mrb[0].mxu0
  %v254 = vadd.f32 0.0, %v253
  %v255 = vpop.f32.mrb[0].mxu0
  %v256 = vpop.f32.mrb[0].mxu0
  %v257 = vadd.f32 0.0, %v256
  %v258 = vpop.f32.mrb[0].mxu0
  %259 = vmatprep.mubr.bf16.mxu0 0
  %260 = vmatmul.mubr.bf16.gmra.mrb[0].mxu0 %v121
  %v261 = vpop.f32.mrb[0].mxu0
  %v262 = vadd.f32 0.0, %v261
  %v263 = vpop.f32.mrb[0].mxu0
  %v264 = vpop.f32.mrb[0].mxu0
  %v265 = vadd.f32 0.0, %v264
  %v266 = vpop.f32.mrb[0].mxu0
  %267 = vmatprep.mubr.bf16.mxu0 0
  %268 = vmatmul.mubr.bf16.gmra.mrb[0].mxu0 %v122
  %v269 = vpop.f32.mrb[0].mxu0
  %v270 = vadd.f32 0.0, %v269
  %v271 = vpop.f32.mrb[0].mxu0
  %v272 = vpop.f32.mrb[0].mxu0
  %v273 = vadd.f32 0.0, %v272
  %v274 = vpop.f32.mrb[0].mxu0
  %275 = vdwg.mxu0
  %v276 = vadd.f32 %v35, %v214
  %v277 = vadd.f32 %v36, %v217
  %v278 = vadd.f32 %v37, %v222
  %v279 = vadd.f32 %v38, %v225
  %v280 = vadd.f32 %v39, %v230
  %v281 = vadd.f32 %v40, %v233
  %v282 = vadd.f32 %v41, %v238
  %v283 = vadd.f32 %v42, %v241
  %v284 = vadd.f32 %v43, %v246
  %v285 = vadd.f32 %v44, %v249
  %v286 = vadd.f32 %v45, %v254
  %v287 = vadd.f32 %v46, %v257
  %v288 = vadd.f32 %v47, %v262
  %v289 = vadd.f32 %v48, %v265
  %v290 = vadd.f32 %v49, %v270
  %v291 = vadd.f32 %v50, %v273
  %292 = vst [vmem:[#allocation2] sm:$0xff] %v276
  %293 = vst [vmem:[#allocation2 + $0x8] sm:$0xff] %v277
  %294 = vst [vmem:[#allocation2 + $0x10] sm:$0xff] %v278
  %295 = vst [vmem:[#allocation2 + $0x18] sm:$0xff] %v279
  %296 = vst [vmem:[#allocation2 + $0x20] sm:$0xff] %v280
  %297 = vst [vmem:[#allocation2 + $0x28] sm:$0xff] %v281
  %298 = vst [vmem:[#allocation2 + $0x30] sm:$0xff] %v282
  %299 = vst [vmem:[#allocation2 + $0x38] sm:$0xff] %v283
  %300 = vst [vmem:[#allocation2 + $0x40] sm:$0xff] %v284
  %301 = vst [vmem:[#allocation2 + $0x48] sm:$0xff] %v285
  %302 = vst [vmem:[#allocation2 + $0x50] sm:$0xff] %v286
  %303 = vst [vmem:[#allocation2 + $0x58] sm:$0xff] %v287
  %304 = vst [vmem:[#allocation2 + $0x60] sm:$0xff] %v288
  %305 = vst [vmem:[#allocation2 + $0x68] sm:$0xff] %v289
  %306 = vst [vmem:[#allocation2 + $0x70] sm:$0xff] %v290
  %307 = vst [vmem:[#allocation2 + $0x78] sm:$0xff] %v291
  // Predicated region
  $region18: #{hifigan_period_discriminator_forward.4} parent=0 // pred_check
    %p308 = pneg %p15
  $region19: #{hifigan_period_discriminator_forward.4} parent=0 // pred_check_branch
    %310 = sbr.rel (%p308) target = $region21
  $region20: #{hifigan_period_discriminator_forward.4} parent=0 // pred_region
    %v311 = vld [vmem:[#allocation2] sm:$0xff]
    %v312 = vld [vmem:[#allocation2 + $0x8] sm:$0xff]
    %v313 = vld [vmem:[#allocation2 + $0x10] sm:$0xff]
    %v314 = vld [vmem:[#allocation2 + $0x18] sm:$0xff]
    %v315 = vld [vmem:[#allocation2 + $0x20] sm:$0xff]
    %v316 = vld [vmem:[#allocation2 + $0x28] sm:$0xff]
    %v317 = vld [vmem:[#allocation2 + $0x30] sm:$0xff]
    %v318 = vld [vmem:[#allocation2 + $0x38] sm:$0xff]
    %v319 = vld [vmem:[#allocation2 + $0x40] sm:$0xff]
    %v320 = vld [vmem:[#allocation2 + $0x48] sm:$0xff]
    %v321 = vld [vmem:[#allocation2 + $0x50] sm:$0xff]
    %v322 = vld [vmem:[#allocation2 + $0x58] sm:$0xff]
    %v323 = vld [vmem:[#allocation2 + $0x60] sm:$0xff]
    %v324 = vld [vmem:[#allocation2 + $0x68] sm:$0xff]
    %v325 = vld [vmem:[#allocation2 + $0x70] sm:$0xff]
    %v326 = vld [vmem:[#allocation2 + $0x78] sm:$0xff]
    %v327 = vld [vmem:[%s2] sm:$0x1]
    %v329 = vlaneseq
    %v330 = vshrl.u32 %v329, 7
    %v331 = vsub.s32 0, %v330
    %v332 = vrot.slane %v327, %v331
    %v334 = vadd.f32 %v311, %v332
    %v335 = vadd.f32 %v312, %v332
    %v336 = vadd.f32 %v313, %v332
    %v337 = vadd.f32 %v314, %v332
    %v338 = vadd.f32 %v315, %v332
    %v339 = vadd.f32 %v316, %v332
    %v340 = vadd.f32 %v317, %v332
    %v341 = vadd.f32 %v318, %v332
    %v342 = vadd.f32 %v319, %v332
    %v343 = vadd.f32 %v320, %v332
    %v344 = vadd.f32 %v321, %v332
    %v345 = vadd.f32 %v322, %v332
    %v346 = vadd.f32 %v323, %v332
    %v347 = vadd.f32 %v324, %v332
    %v348 = vadd.f32 %v325, %v332
    %v349 = vadd.f32 %v326, %v332
    %vm350 = vcmp.ge.f32.partialorder %v334, 0.0
    %vm351 = vcmp.ge.f32.partialorder %v335, 0.0
    %vm352 = vcmp.ge.f32.partialorder %v336, 0.0
    %vm353 = vcmp.ge.f32.partialorder %v337, 0.0
    %vm354 = vcmp.ge.f32.partialorder %v338, 0.0
    %vm355 = vcmp.ge.f32.partialorder %v339, 0.0
    %vm356 = vcmp.ge.f32.partialorder %v340, 0.0
    %vm357 = vcmp.ge.f32.partialorder %v341, 0.0
    %vm358 = vcmp.ge.f32.partialorder %v342, 0.0
    %vm359 = vcmp.ge.f32.partialorder %v343, 0.0
    %vm360 = vcmp.ge.f32.partialorder %v344, 0.0
    %vm361 = vcmp.ge.f32.partialorder %v345, 0.0
    %vm362 = vcmp.ge.f32.partialorder %v346, 0.0
    %vm363 = vcmp.ge.f32.partialorder %v347, 0.0
    %vm364 = vcmp.ge.f32.partialorder %v348, 0.0
    %vm365 = vcmp.ge.f32.partialorder %v349, 0.0
    %v366 = vmul.f32 %v334, 0.1
    %v367 = vmul.f32 %v335, 0.1
    %v368 = vmul.f32 %v336, 0.1
    %v369 = vmul.f32 %v337, 0.1
    %v370 = vmul.f32 %v338, 0.1
    %v371 = vmul.f32 %v339, 0.1
    %v372 = vmul.f32 %v340, 0.1
    %v373 = vmul.f32 %v341, 0.1
    %v374 = vmul.f32 %v342, 0.1
    %v375 = vmul.f32 %v343, 0.1
    %v376 = vmul.f32 %v344, 0.1
    %v377 = vmul.f32 %v345, 0.1
    %v378 = vmul.f32 %v346, 0.1
    %v379 = vmul.f32 %v347, 0.1
    %v380 = vmul.f32 %v348, 0.1
    %v381 = vmul.f32 %v349, 0.1
    %v382 = vsel %vm350, %v334, %v366
    %v383 = vsel %vm351, %v335, %v367
    %v384 = vsel %vm352, %v336, %v368
    %v385 = vsel %vm353, %v337, %v369
    %v386 = vsel %vm354, %v338, %v370
    %v387 = vsel %vm355, %v339, %v371
    %v388 = vsel %vm356, %v340, %v372
    %v389 = vsel %vm357, %v341, %v373
    %v390 = vsel %vm358, %v342, %v374
    %v391 = vsel %vm359, %v343, %v375
    %v392 = vsel %vm360, %v344, %v376
    %v393 = vsel %vm361, %v345, %v377
    %v394 = vsel %vm362, %v346, %v378
    %v395 = vsel %vm363, %v347, %v379
    %v396 = vsel %vm364, %v348, %v380
    %v397 = vsel %vm365, %v349, %v381
    %v398 = vpack.c.bf16 %v383, %v382
    %v399 = vpack.c.bf16 %v385, %v384
    %v400 = vpack.c.bf16 %v387, %v386
    %v401 = vpack.c.bf16 %v389, %v388
    %v402 = vpack.c.bf16 %v391, %v390
    %v403 = vpack.c.bf16 %v393, %v392
    %v404 = vpack.c.bf16 %v395, %v394
    %v405 = vpack.c.bf16 %v397, %v396
    %v414 = vunpack.c.l.b16 %v398
    %v415 = vunpack.c.h.b16 %v398
    %v416 = vunpack.c.l.b16 %v399
    %v417 = vunpack.c.h.b16 %v399
    %v418 = vunpack.c.l.b16 %v400
    %v419 = vunpack.c.h.b16 %v400
    %v420 = vunpack.c.l.b16 %v401
    %v421 = vunpack.c.h.b16 %v401
    %v422 = vunpack.c.l.b16 %v402
    %v423 = vunpack.c.h.b16 %v402
    %v424 = vunpack.c.l.b16 %v403
    %v425 = vunpack.c.h.b16 %v403
    %v426 = vunpack.c.l.b16 %v404
    %v427 = vunpack.c.h.b16 %v404
    %v428 = vunpack.c.l.b16 %v405
    %v429 = vunpack.c.h.b16 %v405
    %v430 = vpack.c.b16 %v414, %v414
    %v431 = vpack.c.b16 %v415, %v415
    %v432 = vpack.c.b16 %v416, %v416
    %v433 = vpack.c.b16 %v417, %v417
    %v434 = vpack.c.b16 %v418, %v418
    %v435 = vpack.c.b16 %v419, %v419
    %v436 = vpack.c.b16 %v420, %v420
    %v437 = vpack.c.b16 %v421, %v421
    %v438 = vpack.c.b16 %v422, %v422
    %v439 = vpack.c.b16 %v423, %v423
    %v440 = vpack.c.b16 %v424, %v424
    %v441 = vpack.c.b16 %v425, %v425
    %v442 = vpack.c.b16 %v426, %v426
    %v443 = vpack.c.b16 %v427, %v427
    %v444 = vpack.c.b16 %v428, %v428
    %v445 = vpack.c.b16 %v429, %v429
    %462 = vst [vmem:[%s3] sm:$0xf] %v430
    %463 = vst [vmem:[%s3 + $0x4] sm:$0xf] %v431
    %464 = vst [vmem:[%s3 + $0x8] sm:$0xf] %v432
    %465 = vst [vmem:[%s3 + $0xc] sm:$0xf] %v433
    %466 = vst [vmem:[%s3 + $0x10] sm:$0xf] %v434
    %467 = vst [vmem:[%s3 + $0x14] sm:$0xf] %v435
    %468 = vst [vmem:[%s3 + $0x18] sm:$0xf] %v436
    %469 = vst [vmem:[%s3 + $0x1c] sm:$0xf] %v437
    %470 = vst [vmem:[%s3 + $0x20] sm:$0xf] %v438
    %471 = vst [vmem:[%s3 + $0x24] sm:$0xf] %v439
    %472 = vst [vmem:[%s3 + $0x28] sm:$0xf] %v440
    %473 = vst [vmem:[%s3 + $0x2c] sm:$0xf] %v441
    %474 = vst [vmem:[%s3 + $0x30] sm:$0xf] %v442
    %475 = vst [vmem:[%s3 + $0x34] sm:$0xf] %v443
    %476 = vst [vmem:[%s3 + $0x38] sm:$0xf] %v444
    %477 = vst [vmem:[%s3 + $0x3c] sm:$0xf] %v445
  $region21: #{hifigan_period_discriminator_forward.4} parent=0 // pred_fallthru
    _
  // Predicated region
  $region22: #{hifigan_period_discriminator_forward.4} parent=0 // pred_check
    _
  $region23: #{hifigan_period_discriminator_forward.4} parent=0 // pred_check_branch
    %479 = sbr.rel (0) target = $region25
  $region24: #{hifigan_period_discriminator_forward.4} parent=0 // pred_region
    _
  $region25: #{hifigan_period_discriminator_forward.4} parent=0 // pred_fallthru
    _
  // Predicated region
  $region26: #{hifigan_period_discriminator_forward.4} parent=0 // pred_check
    _
  $region27: #{hifigan_period_discriminator_forward.4} parent=0 // pred_check_branch
    %481 = sbr.rel (0) target = $region29
  $region28: #{hifigan_period_discriminator_forward.4} parent=0 // pred_region
    _
  $region29: #{hifigan_period_discriminator_forward.4} parent=0 // pred_fallthru
    _

// kernel: hifigan_period_discriminator_forward.7
$region0: #{hifigan_period_discriminator_forward.7}
  #allocation0 [shape = 'u32[]', space=smem, size = 0x4, offset = 0x4, fixed_abs, tag = 'smem constant byte address 0x4 - core index']
  #allocation1 [shape = 'u32[144,128]{1,0:T(1,128)}', space=vmem, size = 0x12000, scoped, tag = 'internal scratch']
  #allocation2 [shape = 'f32[128,128]{1,0:T(8,128)}', space=vmem, size = 0x10000, scoped, tag = 'scratch operand']
  %s0 = inlined_call_operand.vmem [shape: bf16[128,128], index: 0, kind: input, shape index: {}]
  %s1 = inlined_call_operand.vmem [shape: bf16[128,128], index: 1, kind: input, shape index: {}]
  %s2 = inlined_call_operand.vmem [shape: f32[1,128], index: 2, kind: input, shape index: {}]
  %s3 = inlined_call_operand.vmem [shape: f32[128,128], index: 3, kind: output, shape index: {}]
  %s4 = sld [smem:[#allocation0]]
  $region30: #{hifigan_period_discriminator_forward.7} parent=0
    _
  %s6 = ssub.s32 1, %s4
  %s7 = scalar_select 0, %s6, %s4
  // Predicated region
  $region2: #{hifigan_period_discriminator_forward.7} parent=0 // pred_check
    _
  $region3: #{hifigan_period_discriminator_forward.7} parent=0 // pred_check_branch
    %9 = sbr.rel (0) target = $region5
  $region4: #{hifigan_period_discriminator_forward.7} parent=0 // pred_region
    _
  $region5: #{hifigan_period_discriminator_forward.7} parent=0 // pred_fallthru
    _
  // Predicated region
  $region6: #{hifigan_period_discriminator_forward.7} parent=0 // pred_check
    _
  $region7: #{hifigan_period_discriminator_forward.7} parent=0 // pred_check_branch
    %11 = sbr.rel (0) target = $region9
  $region8: #{hifigan_period_discriminator_forward.7} parent=0 // pred_region
    _
  $region9: #{hifigan_period_discriminator_forward.7} parent=0 // pred_fallthru
    _
  // Predicated region
  $region10: #{hifigan_period_discriminator_forward.7} parent=0 // pred_check
    _
  $region11: #{hifigan_period_discriminator_forward.7} parent=0 // pred_check_branch
    %13 = sbr.rel (0) target = $region13
  $region12: #{hifigan_period_discriminator_forward.7} parent=0 // pred_region
    _
  $region13: #{hifigan_period_discriminator_forward.7} parent=0 // pred_fallthru
    _
  %p15 = scmp.eq.s32.totalorder 0, 0
  // Predicated region
  $region14: #{hifigan_period_discriminator_forward.7} parent=0 // pred_check
    %p16 = pneg %p15
  $region15: #{hifigan_period_discriminator_forward.7} parent=0 // pred_check_branch
    %18 = sbr.rel (%p16) target = $region17
  $region16: #{hifigan_period_discriminator_forward.7} parent=0 // pred_region
    %19 = vst [vmem:[#allocation2] sm:$0xff] 0.0
    %20 = vst [vmem:[#allocation2 + $0x8] sm:$0xff] 0.0
    %21 = vst [vmem:[#allocation2 + $0x10] sm:$0xff] 0.0
    %22 = vst [vmem:[#allocation2 + $0x18] sm:$0xff] 0.0
    %23 = vst [vmem:[#allocation2 + $0x20] sm:$0xff] 0.0
    %24 = vst [vmem:[#allocation2 + $0x28] sm:$0xff] 0.0
    %25 = vst [vmem:[#allocation2 + $0x30] sm:$0xff] 0.0
    %26 = vst [vmem:[#allocation2 + $0x38] sm:$0xff] 0.0
    %27 = vst [vmem:[#allocation2 + $0x40] sm:$0xff] 0.0
    %28 = vst [vmem:[#allocation2 + $0x48] sm:$0xff] 0.0
    %29 = vst [vmem:[#allocation2 + $0x50] sm:$0xff] 0.0
    %30 = vst [vmem:[#allocation2 + $0x58] sm:$0xff] 0.0
    %31 = vst [vmem:[#allocation2 + $0x60] sm:$0xff] 0.0
    %32 = vst [vmem:[#allocation2 + $0x68] sm:$0xff] 0.0
    %33 = vst [vmem:[#allocation2 + $0x70] sm:$0xff] 0.0
    %34 = vst [vmem:[#allocation2 + $0x78] sm:$0xff] 0.0
  $region17: #{hifigan_period_discriminator_forward.7} parent=0 // pred_fallthru
    _
  %v35 = vld [vmem:[#allocation2] sm:$0xff]
  %v36 = vld [vmem:[#allocation2 + $0x8] sm:$0xff]
  %v37 = vld [vmem:[#allocation2 + $0x10] sm:$0xff]
  %v38 = vld [vmem:[#allocation2 + $0x18] sm:$0xff]
  %v39 = vld [vmem:[#allocation2 + $0x20] sm:$0xff]
  %v40 = vld [vmem:[#allocation2 + $0x28] sm:$0xff]
  %v41 = vld [vmem:[#allocation2 + $0x30] sm:$0xff]
  %v42 = vld [vmem:[#allocation2 + $0x38] sm:$0xff]
  %v43 = vld [vmem:[#allocation2 + $0x40] sm:$0xff]
  %v44 = vld [vmem:[#allocation2 + $0x48] sm:$0xff]
  %v45 = vld [vmem:[#allocation2 + $0x50] sm:$0xff]
  %v46 = vld [vmem:[#allocation2 + $0x58] sm:$0xff]
  %v47 = vld [vmem:[#allocation2 + $0x60] sm:$0xff]
  %v48 = vld [vmem:[#allocation2 + $0x68] sm:$0xff]
  %v49 = vld [vmem:[#allocation2 + $0x70] sm:$0xff]
  %v50 = vld [vmem:[#allocation2 + $0x78] sm:$0xff]
  %v51 = vld [vmem:[%s0] sm:$0xf]
  %v52 = vld [vmem:[%s0 + $0x4] sm:$0xf]
  %v53 = vld [vmem:[%s0 + $0x8] sm:$0xf]
  %v54 = vld [vmem:[%s0 + $0xc] sm:$0xf]
  %v55 = vld [vmem:[%s0 + $0x10] sm:$0xf]
  %v56 = vld [vmem:[%s0 + $0x14] sm:$0xf]
  %v57 = vld [vmem:[%s0 + $0x18] sm:$0xf]
  %v58 = vld [vmem:[%s0 + $0x1c] sm:$0xf]
  %v59 = vld [vmem:[%s0 + $0x20] sm:$0xf]
  %v60 = vld [vmem:[%s0 + $0x24] sm:$0xf]
  %v61 = vld [vmem:[%s0 + $0x28] sm:$0xf]
  %v62 = vld [vmem:[%s0 + $0x2c] sm:$0xf]
  %v63 = vld [vmem:[%s0 + $0x30] sm:$0xf]
  %v64 = vld [vmem:[%s0 + $0x34] sm:$0xf]
  %v65 = vld [vmem:[%s0 + $0x38] sm:$0xf]
  %v66 = vld [vmem:[%s0 + $0x3c] sm:$0xf]
  %v67 = vld [vmem:[%s1] sm:$0xf]
  %v68 = vld [vmem:[%s1 + $0x4] sm:$0xf]
  %v69 = vld [vmem:[%s1 + $0x8] sm:$0xf]
  %v70 = vld [vmem:[%s1 + $0xc] sm:$0xf]
  %v71 = vld [vmem:[%s1 + $0x10] sm:$0xf]
  %v72 = vld [vmem:[%s1 + $0x14] sm:$0xf]
  %v73 = vld [vmem:[%s1 + $0x18] sm:$0xf]
  %v74 = vld [vmem:[%s1 + $0x1c] sm:$0xf]
  %v75 = vld [vmem:[%s1 + $0x20] sm:$0xf]
  %v76 = vld [vmem:[%s1 + $0x24] sm:$0xf]
  %v77 = vld [vmem:[%s1 + $0x28] sm:$0xf]
  %v78 = vld [vmem:[%s1 + $0x2c] sm:$0xf]
  %v79 = vld [vmem:[%s1 + $0x30] sm:$0xf]
  %v80 = vld [vmem:[%s1 + $0x34] sm:$0xf]
  %v81 = vld [vmem:[%s1 + $0x38] sm:$0xf]
  %v82 = vld [vmem:[%s1 + $0x3c] sm:$0xf]
  %v99 = vunpack.c.l.b16 %v51
  %v100 = vunpack.c.l.b16 %v52
  %v101 = vunpack.c.l.b16 %v53
  %v102 = vunpack.c.l.b16 %v54
  %v103 = vunpack.c.l.b16 %v55
  %v104 = vunpack.c.l.b16 %v56
  %v105 = vunpack.c.l.b16 %v57
  %v106 = vunpack.c.l.b16 %v58
  %v107 = vunpack.c.l.b16 %v59
  %v108 = vunpack.c.l.b16 %v60
  %v109 = vunpack.c.l.b16 %v61
  %v110 = vunpack.c.l.b16 %v62
  %v111 = vunpack.c.l.b16 %v63
  %v112 = vunpack.c.l.b16 %v64
  %v113 = vunpack.c.l.b16 %v65
  %v114 = vunpack.c.l.b16 %v66
  %v115 = vpack.c.b16 %v100, %v99
  %v116 = vpack.c.b16 %v102, %v101
  %v117 = vpack.c.b16 %v104, %v103
  %v118 = vpack.c.b16 %v106, %v105
  %v119 = vpack.c.b16 %v108, %v107
  %v120 = vpack.c.b16 %v110, %v109
  %v121 = vpack.c.b16 %v112, %v111
  %v122 = vpack.c.b16 %v114, %v113
  %v147 = vunpack.c.l.b16 %v67
  %v148 = vunpack.c.l.b16 %v68
  %v149 = vunpack.c.l.b16 %v69
  %v150 = vunpack.c.l.b16 %v70
  %v151 = vunpack.c.l.b16 %v71
  %v152 = vunpack.c.l.b16 %v72
  %v153 = vunpack.c.l.b16 %v73
  %v154 = vunpack.c.l.b16 %v74
  %v155 = vunpack.c.l.b16 %v75
  %v156 = vunpack.c.l.b16 %v76
  %v157 = vunpack.c.l.b16 %v77
  %v158 = vunpack.c.l.b16 %v78
  %v159 = vunpack.c.l.b16 %v79
  %v160 = vunpack.c.l.b16 %v80
  %v161 = vunpack.c.l.b16 %v81
  %v162 = vunpack.c.l.b16 %v82
  %v163 = vpack.c.b16 %v148, %v147
  %v164 = vpack.c.b16 %v150, %v149
  %v165 = vpack.c.b16 %v152, %v151
  %v166 = vpack.c.b16 %v154, %v153
  %v167 = vpack.c.b16 %v156, %v155
  %v168 = vpack.c.b16 %v158, %v157
  %v169 = vpack.c.b16 %v160, %v159
  %v170 = vpack.c.b16 %v162, %v161
  %179 = vmatprep.subr.bf16.mxu0 0
  %180 = vmatpush1.bf16.msra.mxu0 %v163
  %181 = vmatprep.subr.bf16.mxu0 0
  %182 = vmatpush1.bf16.msra.mxu0 %v164
  %183 = vmatprep.subr.bf16.mxu0 0
  %184 = vmatpush1.bf16.msra.mxu0 %v165
  %185 = vmatprep.subr.bf16.mxu0 0
  %186 = vmatpush1.bf16.msra.mxu0 %v166
  %187 = vmatprep.subr.bf16.mxu0 0
  %188 = vmatpush1.bf16.msra.mxu0 %v167
  %189 = vmatprep.subr.bf16.mxu0 0
  %190 = vmatpush1.bf16.msra.mxu0 %v168
  %191 = vmatprep.subr.bf16.mxu0 0
  %192 = vmatpush1.bf16.msra.mxu0 %v169
  %193 = vmatprep.subr.bf16.mxu0 0
  %194 = vmatpush1.bf16.msra.mxu0 %v170
  %195 = vmatprep.subr.bf16.mxu0 0
  %196 = vmatpush1.bf16.msra.mxu0 0
  %197 = vmatprep.subr.bf16.mxu0 0
  %198 = vmatpush1.bf16.msra.mxu0 0
  %199 = vmatprep.subr.bf16.mxu0 0
  %200 = vmatpush1.bf16.msra.mxu0 0
  %201 = vmatprep.subr.bf16.mxu0 0
  %202 = vmatpush1.bf16.msra.mxu0 0
  %203 = vmatprep.subr.bf16.mxu0 0
  %204 = vmatpush1.bf16.msra.mxu0 0
  %205 = vmatprep.subr.bf16.mxu0 0
  %206 = vmatpush1.bf16.msra.mxu0 0
  %207 = vmatprep.subr.bf16.mxu0 0
  %208 = vmatpush1.bf16.msra.mxu0 0
  %209 = vmatprep.subr.bf16.mxu0 0
  %210 = vmatpush1.bf16.msra.mxu0 0
  %211 = vmatprep.mubr.bf16.mxu0 0
  %212 = vmatmul.mubr.bf16.gmra.mrb[0].mxu0 %v115
  %v213 = vpop.f32.mrb[0].mxu0
  %v214 = vadd.f32 0.0, %v213
  %v215 = vpop.f32.mrb[0].mxu0
  %v216 = vpop.f32.mrb[0].mxu0
  %v217 = vadd.f32 0.0, %v216
  %v218 = vpop.f32.mrb[0].mxu0
  %219 = vmatprep.mubr.bf16.mxu0 0
  %220 = vmatmul.mubr.bf16.gmra.mrb[0].mxu0 %v116
  %v221 = vpop.f32.mrb[0].mxu0
  %v222 = vadd.f32 0.0, %v221
  %v223 = vpop.f32.mrb[0].mxu0
  %v224 = vpop.f32.mrb[0].mxu0
  %v225 = vadd.f32 0.0, %v224
  %v226 = vpop.f32.mrb[0].mxu0
  %227 = vmatprep.mubr.bf16.mxu0 0
  %228 = vmatmul.mubr.bf16.gmra.mrb[0].mxu0 %v117
  %v229 = vpop.f32.mrb[0].mxu0
  %v230 = vadd.f32 0.0, %v229
  %v231 = vpop.f32.mrb[0].mxu0
  %v232 = vpop.f32.mrb[0].mxu0
  %v233 = vadd.f32 0.0, %v232
  %v234 = vpop.f32.mrb[0].mxu0
  %235 = vmatprep.mubr.bf16.mxu0 0
  %236 = vmatmul.mubr.bf16.gmra.mrb[0].mxu0 %v118
  %v237 = vpop.f32.mrb[0].mxu0
  %v238 = vadd.f32 0.0, %v237
  %v239 = vpop.f32.mrb[0].mxu0
  %v240 = vpop.f32.mrb[0].mxu0
  %v241 = vadd.f32 0.0, %v240
  %v242 = vpop.f32.mrb[0].mxu0
  %243 = vmatprep.mubr.bf16.mxu0 0
  %244 = vmatmul.mubr.bf16.gmra.mrb[0].mxu0 %v119
  %v245 = vpop.f32.mrb[0].mxu0
  %v246 = vadd.f32 0.0, %v245
  %v247 = vpop.f32.mrb[0].mxu0
  %v248 = vpop.f32.mrb[0].mxu0
  %v249 = vadd.f32 0.0, %v248
  %v250 = vpop.f32.mrb[0].mxu0
  %251 = vmatprep.mubr.bf16.mxu0 0
  %252 = vmatmul.mubr.bf16.gmra.mrb[0].mxu0 %v120
  %v253 = vpop.f32.mrb[0].mxu0
  %v254 = vadd.f32 0.0, %v253
  %v255 = vpop.f32.mrb[0].mxu0
  %v256 = vpop.f32.mrb[0].mxu0
  %v257 = vadd.f32 0.0, %v256
  %v258 = vpop.f32.mrb[0].mxu0
  %259 = vmatprep.mubr.bf16.mxu0 0
  %260 = vmatmul.mubr.bf16.gmra.mrb[0].mxu0 %v121
  %v261 = vpop.f32.mrb[0].mxu0
  %v262 = vadd.f32 0.0, %v261
  %v263 = vpop.f32.mrb[0].mxu0
  %v264 = vpop.f32.mrb[0].mxu0
  %v265 = vadd.f32 0.0, %v264
  %v266 = vpop.f32.mrb[0].mxu0
  %267 = vmatprep.mubr.bf16.mxu0 0
  %268 = vmatmul.mubr.bf16.gmra.mrb[0].mxu0 %v122
  %v269 = vpop.f32.mrb[0].mxu0
  %v270 = vadd.f32 0.0, %v269
  %v271 = vpop.f32.mrb[0].mxu0
  %v272 = vpop.f32.mrb[0].mxu0
  %v273 = vadd.f32 0.0, %v272
  %v274 = vpop.f32.mrb[0].mxu0
  %275 = vdwg.mxu0
  %v276 = vadd.f32 %v35, %v214
  %v277 = vadd.f32 %v36, %v217
  %v278 = vadd.f32 %v37, %v222
  %v279 = vadd.f32 %v38, %v225
  %v280 = vadd.f32 %v39, %v230
  %v281 = vadd.f32 %v40, %v233
  %v282 = vadd.f32 %v41, %v238
  %v283 = vadd.f32 %v42, %v241
  %v284 = vadd.f32 %v43, %v246
  %v285 = vadd.f32 %v44, %v249
  %v286 = vadd.f32 %v45, %v254
  %v287 = vadd.f32 %v46, %v257
  %v288 = vadd.f32 %v47, %v262
  %v289 = vadd.f32 %v48, %v265
  %v290 = vadd.f32 %v49, %v270
  %v291 = vadd.f32 %v50, %v273
  %292 = vst [vmem:[#allocation2] sm:$0xff] %v276
  %293 = vst [vmem:[#allocation2 + $0x8] sm:$0xff] %v277
  %294 = vst [vmem:[#allocation2 + $0x10] sm:$0xff] %v278
  %295 = vst [vmem:[#allocation2 + $0x18] sm:$0xff] %v279
  %296 = vst [vmem:[#allocation2 + $0x20] sm:$0xff] %v280
  %297 = vst [vmem:[#allocation2 + $0x28] sm:$0xff] %v281
  %298 = vst [vmem:[#allocation2 + $0x30] sm:$0xff] %v282
  %299 = vst [vmem:[#allocation2 + $0x38] sm:$0xff] %v283
  %300 = vst [vmem:[#allocation2 + $0x40] sm:$0xff] %v284
  %301 = vst [vmem:[#allocation2 + $0x48] sm:$0xff] %v285
  %302 = vst [vmem:[#allocation2 + $0x50] sm:$0xff] %v286
  %303 = vst [vmem:[#allocation2 + $0x58] sm:$0xff] %v287
  %304 = vst [vmem:[#allocation2 + $0x60] sm:$0xff] %v288
  %305 = vst [vmem:[#allocation2 + $0x68] sm:$0xff] %v289
  %306 = vst [vmem:[#allocation2 + $0x70] sm:$0xff] %v290
  %307 = vst [vmem:[#allocation2 + $0x78] sm:$0xff] %v291
  // Predicated region
  $region18: #{hifigan_period_discriminator_forward.7} parent=0 // pred_check
    %p308 = pneg %p15
  $region19: #{hifigan_period_discriminator_forward.7} parent=0 // pred_check_branch
    %310 = sbr.rel (%p308) target = $region21
  $region20: #{hifigan_period_discriminator_forward.7} parent=0 // pred_region
    %v311 = vld [vmem:[#allocation2] sm:$0xff]
    %v312 = vld [vmem:[#allocation2 + $0x8] sm:$0xff]
    %v313 = vld [vmem:[#allocation2 + $0x10] sm:$0xff]
    %v314 = vld [vmem:[#allocation2 + $0x18] sm:$0xff]
    %v315 = vld [vmem:[#allocation2 + $0x20] sm:$0xff]
    %v316 = vld [vmem:[#allocation2 + $0x28] sm:$0xff]
    %v317 = vld [vmem:[#allocation2 + $0x30] sm:$0xff]
    %v318 = vld [vmem:[#allocation2 + $0x38] sm:$0xff]
    %v319 = vld [vmem:[#allocation2 + $0x40] sm:$0xff]
    %v320 = vld [vmem:[#allocation2 + $0x48] sm:$0xff]
    %v321 = vld [vmem:[#allocation2 + $0x50] sm:$0xff]
    %v322 = vld [vmem:[#allocation2 + $0x58] sm:$0xff]
    %v323 = vld [vmem:[#allocation2 + $0x60] sm:$0xff]
    %v324 = vld [vmem:[#allocation2 + $0x68] sm:$0xff]
    %v325 = vld [vmem:[#allocation2 + $0x70] sm:$0xff]
    %v326 = vld [vmem:[#allocation2 + $0x78] sm:$0xff]
    %v327 = vld [vmem:[%s2] sm:$0x1]
    %v329 = vlaneseq
    %v330 = vshrl.u32 %v329, 7
    %v331 = vsub.s32 0, %v330
    %v332 = vrot.slane %v327, %v331
    %v334 = vadd.f32 %v311, %v332
    %v335 = vadd.f32 %v312, %v332
    %v336 = vadd.f32 %v313, %v332
    %v337 = vadd.f32 %v314, %v332
    %v338 = vadd.f32 %v315, %v332
    %v339 = vadd.f32 %v316, %v332
    %v340 = vadd.f32 %v317, %v332
    %v341 = vadd.f32 %v318, %v332
    %v342 = vadd.f32 %v319, %v332
    %v343 = vadd.f32 %v320, %v332
    %v344 = vadd.f32 %v321, %v332
    %v345 = vadd.f32 %v322, %v332
    %v346 = vadd.f32 %v323, %v332
    %v347 = vadd.f32 %v324, %v332
    %v348 = vadd.f32 %v325, %v332
    %v349 = vadd.f32 %v326, %v332
    %350 = vst [vmem:[%s3] sm:$0xff] %v334
    %351 = vst [vmem:[%s3 + $0x8] sm:$0xff] %v335
    %352 = vst [vmem:[%s3 + $0x10] sm:$0xff] %v336
    %353 = vst [vmem:[%s3 + $0x18] sm:$0xff] %v337
    %354 = vst [vmem:[%s3 + $0x20] sm:$0xff] %v338
    %355 = vst [vmem:[%s3 + $0x28] sm:$0xff] %v339
    %356 = vst [vmem:[%s3 + $0x30] sm:$0xff] %v340
    %357 = vst [vmem:[%s3 + $0x38] sm:$0xff] %v341
    %358 = vst [vmem:[%s3 + $0x40] sm:$0xff] %v342
    %359 = vst [vmem:[%s3 + $0x48] sm:$0xff] %v343
    %360 = vst [vmem:[%s3 + $0x50] sm:$0xff] %v344
    %361 = vst [vmem:[%s3 + $0x58] sm:$0xff] %v345
    %362 = vst [vmem:[%s3 + $0x60] sm:$0xff] %v346
    %363 = vst [vmem:[%s3 + $0x68] sm:$0xff] %v347
    %364 = vst [vmem:[%s3 + $0x70] sm:$0xff] %v348
    %365 = vst [vmem:[%s3 + $0x78] sm:$0xff] %v349
  $region21: #{hifigan_period_discriminator_forward.7} parent=0 // pred_fallthru
    _
  // Predicated region
  $region22: #{hifigan_period_discriminator_forward.7} parent=0 // pred_check
    _
  $region23: #{hifigan_period_discriminator_forward.7} parent=0 // pred_check_branch
    %367 = sbr.rel (0) target = $region25
  $region24: #{hifigan_period_discriminator_forward.7} parent=0 // pred_region
    _
  $region25: #{hifigan_period_discriminator_forward.7} parent=0 // pred_fallthru
    _
  // Predicated region
  $region26: #{hifigan_period_discriminator_forward.7} parent=0 // pred_check
    _
  $region27: #{hifigan_period_discriminator_forward.7} parent=0 // pred_check_branch
    %369 = sbr.rel (0) target = $region29
  $region28: #{hifigan_period_discriminator_forward.7} parent=0 // pred_region
    _
  $region29: #{hifigan_period_discriminator_forward.7} parent=0 // pred_fallthru
    _

</llo_original>
